<compile_context>
chip_gen: v7x
topology: tpu7x:2x2x1
jax: 0.10.0
libtpu: 0.0.40
codegen_flags: <defaults>
</compile_context>

<pallas_src>
import jax
import jax.numpy as jnp
from jax import lax
from jax.experimental import pallas as pl
from jax.experimental.pallas import tpu as pltpu

HIDDEN_DIM = 9      # from the module
VOCAB_SIZE = 16
BATCH = 2
SEQ = 8
OUT_PAD = 128       # lane-dense padded logits width


def rnn_attn_kernel(tok_ref, emb_ref, w_ih_ref, w_hh_ref, b_ih_ref, b_hh_ref,
                    w_att_ref, b_att_ref, w_fc_ref, b_fc_ref,
                    out_ref, rnn_out):
    # tok_ref:   (S*B, 1)  int32 token ids, seq-major rows (row = s*B + b)
    # emb_ref:   (V, H)    embedding table
    # w_ih_ref:  (H, H)    input->hidden weight, (in, out)
    # w_hh_ref:  (H, H)    hidden->hidden weight, (in, out)
    # b_ih/b_hh: (1, H)
    # w_att_ref: (1, H)    attention Linear(H, 1) weight
    # b_att_ref: (1,)      attention bias, SMEM scalar
    # w_fc_ref:  (H, 128)  fc weight zero-padded on the out dim, (in, out)
    # b_fc_ref:  (1, 128)  fc bias zero-padded
    # out_ref:   (B, 128)  padded logits
    # rnn_out:   (S, B, H) VMEM scratch holding all RNN hidden states
    S, B, H = rnn_out.shape
    V = emb_ref.shape[0]
    SB = S * B

    # --- embedding gather fused as a one-hot matmul (no jnp.take glue) ---
    tok = tok_ref[...]                                                 # (S*B, 1)
    onehot = (tok == lax.broadcasted_iota(jnp.int32, (SB, V), 1)
              ).astype(jnp.float32)                                    # (S*B, V)

    # --- hoisted input projection: all timesteps in two matmuls up front ---
    bias = b_ih_ref[...] + b_hh_ref[...]                               # (1, H)
    x_all = jnp.dot(onehot, emb_ref[...],
                    preferred_element_type=jnp.float32)                # (S*B, H)
    pre_all = jnp.dot(x_all, w_ih_ref[...],
                      preferred_element_type=jnp.float32) + bias       # (S*B, H)

    # --- serial recurrence, statically unrolled (S is small & static) so the
    #     scheduler can overlap step t's MXU/EUP latency with step t+1 issue ---
    # TODO(synk): h @ w_hh could be reformulated as a short VPU FMA chain to
    # avoid the per-step MXU push/pop latency; kept on the MXU pending
    # measurement (review marked it "consider / measure per-chip").
    w_hh = w_hh_ref[...]
    h = jnp.zeros((B, H), jnp.float32)
    for t in range(S):
        pre_t = pre_all[t * B:(t + 1) * B, :]                          # (B, H) static slice
        h = jnp.tanh(pre_t + jnp.dot(h, w_hh,
                                     preferred_element_type=jnp.float32))
        rnn_out[t] = h                                                 # static store

    outs = rnn_out[...]                                                # (S, B, H)

    # --- attention kept in (S, B, 1) layout (same layout as outs) ---
    scores = (jnp.sum(outs * w_att_ref[...], axis=-1, keepdims=True)
              + b_att_ref[0])                                          # (S, B, 1)
    scores = scores - jnp.max(scores, axis=0, keepdims=True)
    expw = jnp.exp(scores)
    attn = expw / jnp.sum(expw, axis=0, keepdims=True)                 # (S, B, 1)
    context = jnp.sum(outs * attn, axis=0)                             # (B, H)

    # --- final projection; output is lane-dense (128-wide, zero-padded) ---
    out_ref[...] = (jnp.dot(context, w_fc_ref[...],
                            preferred_element_type=jnp.float32)
                    + b_fc_ref[...])


def make_params(seed=5):
    key = jax.random.PRNGKey(seed)
    ks = jax.random.split(key, 10)
    bound = 1.0 / jnp.sqrt(jnp.float32(HIDDEN_DIM))
    u = lambda k, shape: jax.random.uniform(k, shape, jnp.float32, -bound, bound)
    w_fc_t = u(ks[7], (HIDDEN_DIM, VOCAB_SIZE))
    b_fc = u(ks[8], (1, VOCAB_SIZE))
    return {
        "embedding": jax.random.normal(ks[0], (VOCAB_SIZE, HIDDEN_DIM), jnp.float32),
        "w_ih_t": u(ks[1], (HIDDEN_DIM, HIDDEN_DIM)),   # (in, out)
        "w_hh_t": u(ks[2], (HIDDEN_DIM, HIDDEN_DIM)),   # (in, out)
        "b_ih":   u(ks[3], (1, HIDDEN_DIM)),
        "b_hh":   u(ks[4], (1, HIDDEN_DIM)),
        "w_att":  u(ks[5], (1, HIDDEN_DIM)),
        "b_att":  u(ks[6], (1,)),
        "w_fc_t": w_fc_t,                                # (in, out)
        "b_fc":   b_fc,
        # lane-dense padded copies used by the kernel's final store
        "w_fc_pad": jnp.zeros((HIDDEN_DIM, OUT_PAD), jnp.float32)
                       .at[:, :VOCAB_SIZE].set(w_fc_t),
        "b_fc_pad": jnp.zeros((1, OUT_PAD), jnp.float32)
                       .at[:, :VOCAB_SIZE].set(b_fc),
    }


def rnn_with_attention_forward(token_ids, params):
    # Only remaining glue: a tiny int32 seq-major flatten of the token ids and
    # the final [:, :V] slice; the embedding gather itself runs in the kernel.
    tok_sb = jnp.transpose(token_ids).reshape(SEQ * BATCH, 1).astype(jnp.int32)

    vmem = pl.BlockSpec(memory_space=pltpu.MemorySpace.VMEM)
    smem = pl.BlockSpec(memory_space=pltpu.MemorySpace.SMEM)
    kernel = pl.pallas_call(
        rnn_attn_kernel,
        out_shape=jax.ShapeDtypeStruct((BATCH, OUT_PAD), jnp.float32),
        in_specs=[vmem,                    # token ids
                  vmem,                    # embedding table
                  vmem, vmem, vmem, vmem,  # w_ih, w_hh, b_ih, b_hh
                  vmem,                    # w_att
                  smem,                    # b_att scalar
                  vmem, vmem],             # w_fc_pad, b_fc_pad
        out_specs=vmem,
        scratch_shapes=[pltpu.VMEM((SEQ, BATCH, HIDDEN_DIM), jnp.float32)],
    )
    # NOTE: with a real batch (B >> 2) on v7x, add a batch grid axis with
    # dimension_semantics=("parallel",) so both TensorCores are used, and use
    # an online-softmax attention to keep VMEM O(B*H); unnecessary at toy size.
    logits_pad = kernel(tok_sb, params["embedding"],
                        params["w_ih_t"], params["w_hh_t"],
                        params["b_ih"], params["b_hh"],
                        params["w_att"], params["b_att"],
                        params["w_fc_pad"], params["b_fc_pad"])
    return logits_pad[:, :VOCAB_SIZE]


def reference_forward(token_ids, params):
    # Pure-JAX reference for correctness checking.
    x = jnp.take(params["embedding"], token_ids, axis=0)     # (B, S, H)
    xs = jnp.transpose(x, (1, 0, 2))                         # (S, B, H)

    def step(h, x_t):
        h_new = jnp.tanh(x_t @ params["w_ih_t"] + h @ params["w_hh_t"]
                         + params["b_ih"][0] + params["b_hh"][0])
        return h_new, h_new

    h0 = jnp.zeros((BATCH, HIDDEN_DIM), jnp.float32)
    _, outs = lax.scan(step, h0, xs)                          # (S, B, H)
    scores = jnp.sum(outs * params["w_att"][0], axis=-1) + params["b_att"][0]
    attn = jax.nn.softmax(scores, axis=0)                     # (S, B)
    context = jnp.sum(outs * attn[:, :, None], axis=0)        # (B, H)
    return context @ params["w_fc_t"] + params["b_fc"]


if __name__ == "__main__":
    params = make_params(seed=5)
    key = jax.random.PRNGKey(0)
    token_ids = jax.random.randint(key, (BATCH, SEQ), 0, VOCAB_SIZE, jnp.int32)

    logits = rnn_with_attention_forward(token_ids, params)
    logits = jax.block_until_ready(logits)

    ref = reference_forward(token_ids, params)
    assert logits.shape == (BATCH, VOCAB_SIZE)
    assert jnp.allclose(logits, ref, atol=1e-4, rtol=1e-4), \
        float(jnp.max(jnp.abs(logits - ref)))
    # TODO(synk): original PyTorch __init__ never defines embeddings/rnn/attention
    # (and `context` / `vocab_size` are undefined); the standard shape-consistent
    # reconstruction above is implemented.
    print("KERNEL_OK")
</pallas_src>

<mosaic_0001>
module attributes {stable_mosaic.version = 11 : i64} {
  func.func @rnn_attn_kernel(%arg0: memref<16x1xi32, #tpu.memory_space<vmem>>, %arg1: memref<16x9xf32, #tpu.memory_space<vmem>>, %arg2: memref<9x9xf32, #tpu.memory_space<vmem>>, %arg3: memref<9x9xf32, #tpu.memory_space<vmem>>, %arg4: memref<1x9xf32, #tpu.memory_space<vmem>>, %arg5: memref<1x9xf32, #tpu.memory_space<vmem>>, %arg6: memref<1x9xf32, #tpu.memory_space<vmem>>, %arg7: memref<1xf32, #tpu.memory_space<smem>>, %arg8: memref<9x128xf32, #tpu.memory_space<vmem>>, %arg9: memref<1x128xf32, #tpu.memory_space<vmem>>, %arg10: memref<2x128xf32, #tpu.memory_space<vmem>>, %arg11: memref<8x2x9xf32, #tpu.memory_space<vmem>>) attributes {dimension_semantics = [], scalar_prefetch = 0 : i64, scratch_operands = 1 : i64, tpu.core_type = #tpu.core_type<tc>} {
    %c0 = arith.constant 0 : index
    %c0_0 = arith.constant 0 : index
    %0 = vector.load %arg0[%c0, %c0_0] : memref<16x1xi32, #tpu.memory_space<vmem>>, vector<16x1xi32>
    %1 = tpu.iota {dimensions = array<i32: 1>} : vector<16x16xi32>
    %2 = vector.broadcast %0 : vector<16x1xi32> to vector<16x16xi32>
    %3 = arith.cmpi eq, %2, %1 : vector<16x16xi32>
    %4 = arith.extui %3 : vector<16x16xi1> to vector<16x16xi32>
    %5 = arith.sitofp %4 : vector<16x16xi32> to vector<16x16xf32>
    %c0_1 = arith.constant 0 : index
    %c0_2 = arith.constant 0 : index
    %6 = vector.load %arg4[%c0_1, %c0_2] : memref<1x9xf32, #tpu.memory_space<vmem>>, vector<1x9xf32>
    %c0_3 = arith.constant 0 : index
    %c0_4 = arith.constant 0 : index
    %7 = vector.load %arg5[%c0_3, %c0_4] : memref<1x9xf32, #tpu.memory_space<vmem>>, vector<1x9xf32>
    %8 = arith.addf %6, %7 : vector<1x9xf32>
    %c0_5 = arith.constant 0 : index
    %c0_6 = arith.constant 0 : index
    %9 = vector.load %arg1[%c0_5, %c0_6] : memref<16x9xf32, #tpu.memory_space<vmem>>, vector<16x9xf32>
    %cst = arith.constant dense<0.000000e+00> : vector<16x9xf32>
    %10 = tpu.matmul %5, %9, %cst {dimension_numbers = #tpu.dot_dimension_numbers<[1], [0], [0], [1], [0, 0, 1, 1], [], []>} : vector<16x16xf32>, vector<16x9xf32>, vector<16x9xf32> -> vector<16x9xf32>
    %c0_7 = arith.constant 0 : index
    %c0_8 = arith.constant 0 : index
    %11 = vector.load %arg2[%c0_7, %c0_8] : memref<9x9xf32, #tpu.memory_space<vmem>>, vector<9x9xf32>
    %cst_9 = arith.constant dense<0.000000e+00> : vector<16x9xf32>
    %12 = tpu.matmul %10, %11, %cst_9 {dimension_numbers = #tpu.dot_dimension_numbers<[1], [0], [0], [1], [0, 0, 1, 1], [], []>} : vector<16x9xf32>, vector<9x9xf32>, vector<16x9xf32> -> vector<16x9xf32>
    %13 = vector.broadcast %8 : vector<1x9xf32> to vector<16x9xf32>
    %14 = arith.addf %12, %13 : vector<16x9xf32>
    %c0_10 = arith.constant 0 : index
    %c0_11 = arith.constant 0 : index
    %15 = vector.load %arg3[%c0_10, %c0_11] : memref<9x9xf32, #tpu.memory_space<vmem>>, vector<9x9xf32>
    %cst_12 = arith.constant 0.000000e+00 : f32
    %16 = vector.broadcast %cst_12 : f32 to vector<2x9xf32>
    %17 = vector.extract_strided_slice %14 {offsets = [0, 0], sizes = [2, 9], strides = [1, 1]} : vector<16x9xf32> to vector<2x9xf32>
    %cst_13 = arith.constant dense<0.000000e+00> : vector<2x9xf32>
    %18 = tpu.matmul %16, %15, %cst_13 {dimension_numbers = #tpu.dot_dimension_numbers<[1], [0], [0], [1], [0, 0, 1, 1], [], []>} : vector<2x9xf32>, vector<9x9xf32>, vector<2x9xf32> -> vector<2x9xf32>
    %19 = arith.addf %17, %18 : vector<2x9xf32>
    %20 = math.tanh %19 : vector<2x9xf32>
    %c0_14 = arith.constant 0 : index
    %c0_15 = arith.constant 0 : index
    %c0_16 = arith.constant 0 : index
    %21 = vector.load %arg11[%c0_14, %c0_15, %c0_16] : memref<8x2x9xf32, #tpu.memory_space<vmem>>, vector<1x2x9xf32>
    %22 = vector.shape_cast %21 : vector<1x2x9xf32> to vector<2x9xf32>
    %23 = vector.shape_cast %20 : vector<2x9xf32> to vector<1x2x9xf32>
    tpu.vector_store %arg11[%c0_14, %c0_15, %c0_16], %23 {strides = array<i32>} : memref<8x2x9xf32, #tpu.memory_space<vmem>>, vector<1x2x9xf32>,
    %24 = vector.extract_strided_slice %14 {offsets = [2, 0], sizes = [2, 9], strides = [1, 1]} : vector<16x9xf32> to vector<2x9xf32>
    %cst_17 = arith.constant dense<0.000000e+00> : vector<2x9xf32>
    %25 = tpu.matmul %20, %15, %cst_17 {dimension_numbers = #tpu.dot_dimension_numbers<[1], [0], [0], [1], [0, 0, 1, 1], [], []>} : vector<2x9xf32>, vector<9x9xf32>, vector<2x9xf32> -> vector<2x9xf32>
    %26 = arith.addf %24, %25 : vector<2x9xf32>
    %27 = math.tanh %26 : vector<2x9xf32>
    %c1 = arith.constant 1 : index
    %c0_18 = arith.constant 0 : index
    %c0_19 = arith.constant 0 : index
    %28 = vector.load %arg11[%c1, %c0_18, %c0_19] : memref<8x2x9xf32, #tpu.memory_space<vmem>>, vector<1x2x9xf32>
    %29 = vector.shape_cast %28 : vector<1x2x9xf32> to vector<2x9xf32>
    %30 = vector.shape_cast %27 : vector<2x9xf32> to vector<1x2x9xf32>
    tpu.vector_store %arg11[%c1, %c0_18, %c0_19], %30 {strides = array<i32>} : memref<8x2x9xf32, #tpu.memory_space<vmem>>, vector<1x2x9xf32>,
    %31 = vector.extract_strided_slice %14 {offsets = [4, 0], sizes = [2, 9], strides = [1, 1]} : vector<16x9xf32> to vector<2x9xf32>
    %cst_20 = arith.constant dense<0.000000e+00> : vector<2x9xf32>
    %32 = tpu.matmul %27, %15, %cst_20 {dimension_numbers = #tpu.dot_dimension_numbers<[1], [0], [0], [1], [0, 0, 1, 1], [], []>} : vector<2x9xf32>, vector<9x9xf32>, vector<2x9xf32> -> vector<2x9xf32>
    %33 = arith.addf %31, %32 : vector<2x9xf32>
    %34 = math.tanh %33 : vector<2x9xf32>
    %c2 = arith.constant 2 : index
    %c0_21 = arith.constant 0 : index
    %c0_22 = arith.constant 0 : index
    %35 = vector.load %arg11[%c2, %c0_21, %c0_22] : memref<8x2x9xf32, #tpu.memory_space<vmem>>, vector<1x2x9xf32>
    %36 = vector.shape_cast %35 : vector<1x2x9xf32> to vector<2x9xf32>
    %37 = vector.shape_cast %34 : vector<2x9xf32> to vector<1x2x9xf32>
    tpu.vector_store %arg11[%c2, %c0_21, %c0_22], %37 {strides = array<i32>} : memref<8x2x9xf32, #tpu.memory_space<vmem>>, vector<1x2x9xf32>,
    %38 = vector.extract_strided_slice %14 {offsets = [6, 0], sizes = [2, 9], strides = [1, 1]} : vector<16x9xf32> to vector<2x9xf32>
    %cst_23 = arith.constant dense<0.000000e+00> : vector<2x9xf32>
    %39 = tpu.matmul %34, %15, %cst_23 {dimension_numbers = #tpu.dot_dimension_numbers<[1], [0], [0], [1], [0, 0, 1, 1], [], []>} : vector<2x9xf32>, vector<9x9xf32>, vector<2x9xf32> -> vector<2x9xf32>
    %40 = arith.addf %38, %39 : vector<2x9xf32>
    %41 = math.tanh %40 : vector<2x9xf32>
    %c3 = arith.constant 3 : index
    %c0_24 = arith.constant 0 : index
    %c0_25 = arith.constant 0 : index
    %42 = vector.load %arg11[%c3, %c0_24, %c0_25] : memref<8x2x9xf32, #tpu.memory_space<vmem>>, vector<1x2x9xf32>
    %43 = vector.shape_cast %42 : vector<1x2x9xf32> to vector<2x9xf32>
    %44 = vector.shape_cast %41 : vector<2x9xf32> to vector<1x2x9xf32>
    tpu.vector_store %arg11[%c3, %c0_24, %c0_25], %44 {strides = array<i32>} : memref<8x2x9xf32, #tpu.memory_space<vmem>>, vector<1x2x9xf32>,
    %45 = vector.extract_strided_slice %14 {offsets = [8, 0], sizes = [2, 9], strides = [1, 1]} : vector<16x9xf32> to vector<2x9xf32>
    %cst_26 = arith.constant dense<0.000000e+00> : vector<2x9xf32>
    %46 = tpu.matmul %41, %15, %cst_26 {dimension_numbers = #tpu.dot_dimension_numbers<[1], [0], [0], [1], [0, 0, 1, 1], [], []>} : vector<2x9xf32>, vector<9x9xf32>, vector<2x9xf32> -> vector<2x9xf32>
    %47 = arith.addf %45, %46 : vector<2x9xf32>
    %48 = math.tanh %47 : vector<2x9xf32>
    %c4 = arith.constant 4 : index
    %c0_27 = arith.constant 0 : index
    %c0_28 = arith.constant 0 : index
    %49 = vector.load %arg11[%c4, %c0_27, %c0_28] : memref<8x2x9xf32, #tpu.memory_space<vmem>>, vector<1x2x9xf32>
    %50 = vector.shape_cast %49 : vector<1x2x9xf32> to vector<2x9xf32>
    %51 = vector.shape_cast %48 : vector<2x9xf32> to vector<1x2x9xf32>
    tpu.vector_store %arg11[%c4, %c0_27, %c0_28], %51 {strides = array<i32>} : memref<8x2x9xf32, #tpu.memory_space<vmem>>, vector<1x2x9xf32>,
    %52 = vector.extract_strided_slice %14 {offsets = [10, 0], sizes = [2, 9], strides = [1, 1]} : vector<16x9xf32> to vector<2x9xf32>
    %cst_29 = arith.constant dense<0.000000e+00> : vector<2x9xf32>
    %53 = tpu.matmul %48, %15, %cst_29 {dimension_numbers = #tpu.dot_dimension_numbers<[1], [0], [0], [1], [0, 0, 1, 1], [], []>} : vector<2x9xf32>, vector<9x9xf32>, vector<2x9xf32> -> vector<2x9xf32>
    %54 = arith.addf %52, %53 : vector<2x9xf32>
    %55 = math.tanh %54 : vector<2x9xf32>
    %c5 = arith.constant 5 : index
    %c0_30 = arith.constant 0 : index
    %c0_31 = arith.constant 0 : index
    %56 = vector.load %arg11[%c5, %c0_30, %c0_31] : memref<8x2x9xf32, #tpu.memory_space<vmem>>, vector<1x2x9xf32>
    %57 = vector.shape_cast %56 : vector<1x2x9xf32> to vector<2x9xf32>
    %58 = vector.shape_cast %55 : vector<2x9xf32> to vector<1x2x9xf32>
    tpu.vector_store %arg11[%c5, %c0_30, %c0_31], %58 {strides = array<i32>} : memref<8x2x9xf32, #tpu.memory_space<vmem>>, vector<1x2x9xf32>,
    %59 = vector.extract_strided_slice %14 {offsets = [12, 0], sizes = [2, 9], strides = [1, 1]} : vector<16x9xf32> to vector<2x9xf32>
    %cst_32 = arith.constant dense<0.000000e+00> : vector<2x9xf32>
    %60 = tpu.matmul %55, %15, %cst_32 {dimension_numbers = #tpu.dot_dimension_numbers<[1], [0], [0], [1], [0, 0, 1, 1], [], []>} : vector<2x9xf32>, vector<9x9xf32>, vector<2x9xf32> -> vector<2x9xf32>
    %61 = arith.addf %59, %60 : vector<2x9xf32>
    %62 = math.tanh %61 : vector<2x9xf32>
    %c6 = arith.constant 6 : index
    %c0_33 = arith.constant 0 : index
    %c0_34 = arith.constant 0 : index
    %63 = vector.load %arg11[%c6, %c0_33, %c0_34] : memref<8x2x9xf32, #tpu.memory_space<vmem>>, vector<1x2x9xf32>
    %64 = vector.shape_cast %63 : vector<1x2x9xf32> to vector<2x9xf32>
    %65 = vector.shape_cast %62 : vector<2x9xf32> to vector<1x2x9xf32>
    tpu.vector_store %arg11[%c6, %c0_33, %c0_34], %65 {strides = array<i32>} : memref<8x2x9xf32, #tpu.memory_space<vmem>>, vector<1x2x9xf32>,
    %66 = vector.extract_strided_slice %14 {offsets = [14, 0], sizes = [2, 9], strides = [1, 1]} : vector<16x9xf32> to vector<2x9xf32>
    %cst_35 = arith.constant dense<0.000000e+00> : vector<2x9xf32>
    %67 = tpu.matmul %62, %15, %cst_35 {dimension_numbers = #tpu.dot_dimension_numbers<[1], [0], [0], [1], [0, 0, 1, 1], [], []>} : vector<2x9xf32>, vector<9x9xf32>, vector<2x9xf32> -> vector<2x9xf32>
    %68 = arith.addf %66, %67 : vector<2x9xf32>
    %69 = math.tanh %68 : vector<2x9xf32>
    %c7 = arith.constant 7 : index
    %c0_36 = arith.constant 0 : index
    %c0_37 = arith.constant 0 : index
    %70 = vector.load %arg11[%c7, %c0_36, %c0_37] : memref<8x2x9xf32, #tpu.memory_space<vmem>>, vector<1x2x9xf32>
    %71 = vector.shape_cast %70 : vector<1x2x9xf32> to vector<2x9xf32>
    %72 = vector.shape_cast %69 : vector<2x9xf32> to vector<1x2x9xf32>
    tpu.vector_store %arg11[%c7, %c0_36, %c0_37], %72 {strides = array<i32>} : memref<8x2x9xf32, #tpu.memory_space<vmem>>, vector<1x2x9xf32>,
    %c0_38 = arith.constant 0 : index
    %c0_39 = arith.constant 0 : index
    %c0_40 = arith.constant 0 : index
    %73 = vector.load %arg11[%c0_38, %c0_39, %c0_40] : memref<8x2x9xf32, #tpu.memory_space<vmem>>, vector<8x2x9xf32>
    %c0_41 = arith.constant 0 : index
    %c0_42 = arith.constant 0 : index
    %74 = vector.load %arg6[%c0_41, %c0_42] : memref<1x9xf32, #tpu.memory_space<vmem>>, vector<1x9xf32>
    %75 = vector.shape_cast %74 : vector<1x9xf32> to vector<1x1x9xf32>
    %76 = vector.broadcast %75 : vector<1x1x9xf32> to vector<8x2x9xf32>
    %77 = arith.mulf %73, %76 : vector<8x2x9xf32>
    %cst_43 = arith.constant dense<0.000000e+00> : vector<8x2xf32>
    %78 = vector.multi_reduction <add>, %77, %cst_43 [2] : vector<8x2x9xf32> to vector<8x2xf32>
    %79 = vector.shape_cast %78 : vector<8x2xf32> to vector<8x2x1xf32>
    %c0_44 = arith.constant 0 : index
    %80 = memref.load %arg7[%c0_44] : memref<1xf32, #tpu.memory_space<smem>>
    %81 = vector.broadcast %80 : f32 to vector<8x2x1xf32>
    %82 = arith.addf %79, %81 : vector<8x2x1xf32>
    %cst_45 = arith.constant dense<0xFF800000> : vector<2x1xf32>
    %83 = vector.multi_reduction <maximumf>, %82, %cst_45 [0] : vector<8x2x1xf32> to vector<2x1xf32>
    %84 = vector.shape_cast %83 : vector<2x1xf32> to vector<1x2x1xf32>
    %85 = vector.broadcast %84 : vector<1x2x1xf32> to vector<8x2x1xf32>
    %86 = arith.subf %82, %85 : vector<8x2x1xf32>
    %87 = math.exp %86 : vector<8x2x1xf32>
    %cst_46 = arith.constant dense<0.000000e+00> : vector<2x1xf32>
    %88 = vector.multi_reduction <add>, %87, %cst_46 [0] : vector<8x2x1xf32> to vector<2x1xf32>
    %89 = vector.shape_cast %88 : vector<2x1xf32> to vector<1x2x1xf32>
    %90 = vector.broadcast %89 : vector<1x2x1xf32> to vector<8x2x1xf32>
    %91 = arith.divf %87, %90 : vector<8x2x1xf32>
    %92 = vector.broadcast %91 : vector<8x2x1xf32> to vector<8x2x9xf32>
    %93 = arith.mulf %73, %92 : vector<8x2x9xf32>
    %cst_47 = arith.constant dense<0.000000e+00> : vector<2x9xf32>
    %94 = vector.multi_reduction <add>, %93, %cst_47 [0] : vector<8x2x9xf32> to vector<2x9xf32>
    %c0_48 = arith.constant 0 : index
    %c0_49 = arith.constant 0 : index
    %95 = vector.load %arg8[%c0_48, %c0_49] : memref<9x128xf32, #tpu.memory_space<vmem>>, vector<9x128xf32>
    %cst_50 = arith.constant dense<0.000000e+00> : vector<2x128xf32>
    %96 = tpu.matmul %94, %95, %cst_50 {dimension_numbers = #tpu.dot_dimension_numbers<[1], [0], [0], [1], [0, 0, 1, 1], [], []>} : vector<2x9xf32>, vector<9x128xf32>, vector<2x128xf32> -> vector<2x128xf32>
    %c0_51 = arith.constant 0 : index
    %c0_52 = arith.constant 0 : index
    %97 = vector.load %arg9[%c0_51, %c0_52] : memref<1x128xf32, #tpu.memory_space<vmem>>, vector<1x128xf32>
    %98 = vector.broadcast %97 : vector<1x128xf32> to vector<2x128xf32>
    %99 = arith.addf %96, %98 : vector<2x128xf32>
    %c0_53 = arith.constant 0 : index
    %c0_54 = arith.constant 0 : index
    %100 = vector.load %arg10[%c0_53, %c0_54] : memref<2x128xf32, #tpu.memory_space<vmem>>, vector<2x128xf32>
    tpu.vector_store %arg10[%c0_53, %c0_54], %99 {strides = array<i32>} : memref<2x128xf32, #tpu.memory_space<vmem>>, vector<2x128xf32>,
    return
  }
}

</mosaic_0001>

<llo_original>
// kernel: tpu_custom_call.1
$region0: #{tpu_custom_call.1}
  #allocation0 [shape = 'u32[]', space=smem, size = 0x4, offset = 0x4, fixed_abs, tag = 'smem constant byte address 0x4 - core index']
  #allocation1 [shape = 'u32[144,128]{1,0:T(1,128)}', space=vmem, size = 0x12000, scoped, tag = 'internal scratch']
  #allocation2 [shape = 'f32[8,2,9]{2,1,0:T(2,128)}', space=vmem, size = 0x2000, scoped, tag = 'scratch operand']
  #allocation3 [shape = 'f32[1]{0:T(128)S(6)}', space=smem, size = 0x200, scoped, tag = 'scoped memory for tpu_custom_call.1']
  %s0 = inlined_call_operand.vmem [shape: s32[16,1], index: 0, kind: input, shape index: {}]
  %s1 = inlined_call_operand.vmem [shape: f32[16,9], index: 1, kind: input, shape index: {}]
  %s2 = inlined_call_operand.hbm [shape: f32[9,9], index: 2, kind: input, shape index: {}]
  %s3 = inlined_call_operand.vmem [shape: f32[9,9], index: 3, kind: input, shape index: {}]
  %s4 = inlined_call_operand.vmem [shape: f32[1,9], index: 4, kind: input, shape index: {}]
  %s5 = inlined_call_operand.vmem [shape: f32[1,9], index: 5, kind: input, shape index: {}]
  %s6 = inlined_call_operand.vmem [shape: f32[1,9], index: 6, kind: input, shape index: {}]
  %s7 = inlined_call_operand.<no memory space> [shape: f32[1], index: 7, kind: input, shape index: {}]
  %s8 = inlined_call_operand.hbm [shape: f32[9,128], index: 8, kind: input, shape index: {}]
  %s9 = inlined_call_operand.vmem [shape: f32[1,128], index: 9, kind: input, shape index: {}]
  %s10 = inlined_call_operand.hbm [shape: f32[2,128], index: 10, kind: output, shape index: {}]
  %s11 = sld [smem:[#allocation0]]
  $region58: #{tpu_custom_call.1} parent=0
    _
  %s13 = ssub.s32 1, %s11
  %s14 = scalar_select 0, %s13, %s11
  %15 = sst [smem:[#allocation3]] %s7
  $region1: #{tpu_custom_call.1} parent=0
    #allocation4 [shape = 'u8[8192]{0}', space=vmem, size = 0x2000, scoped, tag = 'input window, operand 2, single buffered']
    #allocation5 [shape = 's32[1]{0}', space=sflag, size = 0x4, scoped, tag = 'scoped memory for tpu_custom_call.1']
    #allocation6 [shape = 's32[1]{0}', space=sflag, size = 0x4, scoped, tag = 'scoped memory for tpu_custom_call.1']
    #allocation7 [shape = 'u8[8192]{0}', space=vmem, size = 0x2000, scoped, tag = 'input window, operand 8, single buffered']
    #allocation8 [shape = 's32[1]{0}', space=sflag, size = 0x4, scoped, tag = 'scoped memory for tpu_custom_call.1']
    #allocation9 [shape = 'u8[1024]{0}', space=vmem, size = 0x400, scoped, tag = 'output window, operand 0, single buffered']
    %16 = vsyncpa [#allocation5], 0
    %17 = vsyncpa [#allocation8], 0
    %18 = vsyncpa [#allocation6], 0
    // Predicated region
    $region2: #{tpu_custom_call.1} parent=1 // pred_check
      _
    $region3: #{tpu_custom_call.1} parent=1 // pred_check_branch
      %20 = sbr.rel (0) target = $region5
    $region4: #{tpu_custom_call.1} parent=1 // pred_region
      _
    $region5: #{tpu_custom_call.1} parent=1 // pred_fallthru
      _
    // Predicated region
    $region6: #{tpu_custom_call.1} parent=1 // pred_check
      _
    $region7: #{tpu_custom_call.1} parent=1 // pred_check_branch
      %22 = sbr.rel (0) target = $region9
    $region8: #{tpu_custom_call.1} parent=1 // pred_region
      _
    $region9: #{tpu_custom_call.1} parent=1 // pred_fallthru
      _
    // Predicated region
    $region10: #{tpu_custom_call.1} parent=1 // pred_check
      _
    $region11: #{tpu_custom_call.1} parent=1 // pred_check_branch
      %24 = sbr.rel (0) target = $region13
    $region12: #{tpu_custom_call.1} parent=1 // pred_region
      %s26 = ssub.s32 256, 256
      %27 = vsyncadd [#allocation5], %s26
      %s28 = sshll.u32 [#allocation4], 4
      %s29 = int_to_ptr.vmem [resolvable:$true] %s28
      %34 = dma.hbm_to_vmem [thread:$0]  %s2, 256, %s29, [#allocation5], 128, 128, 8
    $region13: #{tpu_custom_call.1} parent=1 // pred_fallthru
      _
    // Predicated region
    $region14: #{tpu_custom_call.1} parent=1 // pred_check
      _
    $region15: #{tpu_custom_call.1} parent=1 // pred_check_branch
      %36 = sbr.rel (0) target = $region17
    $region16: #{tpu_custom_call.1} parent=1 // pred_region
      _
    $region17: #{tpu_custom_call.1} parent=1 // pred_fallthru
      _
    // Predicated region
    $region18: #{tpu_custom_call.1} parent=1 // pred_check
      _
    $region19: #{tpu_custom_call.1} parent=1 // pred_check_branch
      %38 = sbr.rel (0) target = $region21
    $region20: #{tpu_custom_call.1} parent=1 // pred_region
      _
    $region21: #{tpu_custom_call.1} parent=1 // pred_fallthru
      _
    // Predicated region
    $region22: #{tpu_custom_call.1} parent=1 // pred_check
      _
    $region23: #{tpu_custom_call.1} parent=1 // pred_check_branch
      %40 = sbr.rel (0) target = $region25
    $region24: #{tpu_custom_call.1} parent=1 // pred_region
      _
    $region25: #{tpu_custom_call.1} parent=1 // pred_fallthru
      _
    // Predicated region
    $region26: #{tpu_custom_call.1} parent=1 // pred_check
      _
    $region27: #{tpu_custom_call.1} parent=1 // pred_check_branch
      %42 = sbr.rel (0) target = $region29
    $region28: #{tpu_custom_call.1} parent=1 // pred_region
      _
    $region29: #{tpu_custom_call.1} parent=1 // pred_fallthru
      _
    // Predicated region
    $region30: #{tpu_custom_call.1} parent=1 // pred_check
      _
    $region31: #{tpu_custom_call.1} parent=1 // pred_check_branch
      %44 = sbr.rel (0) target = $region33
    $region32: #{tpu_custom_call.1} parent=1 // pred_region
      _
    $region33: #{tpu_custom_call.1} parent=1 // pred_fallthru
      _
    // Predicated region
    $region34: #{tpu_custom_call.1} parent=1 // pred_check
      _
    $region35: #{tpu_custom_call.1} parent=1 // pred_check_branch
      %46 = sbr.rel (0) target = $region37
    $region36: #{tpu_custom_call.1} parent=1 // pred_region
      %s48 = ssub.s32 256, 256
      %49 = vsyncadd [#allocation8], %s48
      %s50 = sshll.u32 [#allocation7], 4
      %s51 = int_to_ptr.vmem [resolvable:$true] %s50
      %56 = dma.hbm_to_vmem [thread:$0]  %s8, 256, %s51, [#allocation8], 128, 128, 8
    $region37: #{tpu_custom_call.1} parent=1 // pred_fallthru
      _
    // Predicated region
    $region38: #{tpu_custom_call.1} parent=1 // pred_check
      _
    $region39: #{tpu_custom_call.1} parent=1 // pred_check_branch
      %58 = sbr.rel (0) target = $region41
    $region40: #{tpu_custom_call.1} parent=1 // pred_region
      _
    $region41: #{tpu_custom_call.1} parent=1 // pred_fallthru
      _
    // Predicated region
    $region42: #{tpu_custom_call.1} parent=1 // pred_check
      _
    $region43: #{tpu_custom_call.1} parent=1 // pred_check_branch
      %60 = sbr.rel (0) target = $region45
    $region44: #{tpu_custom_call.1} parent=1 // pred_region
      %61 = dma.done [#allocation5], 256
    $region45: #{tpu_custom_call.1} parent=1 // pred_fallthru
      _
    // Predicated region
    $region46: #{tpu_custom_call.1} parent=1 // pred_check
      _
    $region47: #{tpu_custom_call.1} parent=1 // pred_check_branch
      %63 = sbr.rel (0) target = $region49
    $region48: #{tpu_custom_call.1} parent=1 // pred_region
      %64 = dma.done [#allocation8], 256
    $region49: #{tpu_custom_call.1} parent=1 // pred_fallthru
      _
    %v65 = vld [vmem:[%s0] sm:$0xff]
    %v66 = vld [vmem:[%s0 + $0x8] sm:$0xff]
    %v67 = vlaneseq
    %v68 = vand.u32 %v67, 127
    %69 = vset.pattern.permute.xlu0 0
    %70 = vperm.xlu0 %69, %v65
    %v71 = vpop.permute.xlu0 %70
    %72 = vset.pattern.permute.xlu0 0
    %73 = vperm.xlu0 %72, %v66
    %v74 = vpop.permute.xlu0 %73
    %vm75 = vcmp.eq.s32.totalorder %v71, %v68
    %vm76 = vcmp.eq.s32.totalorder %v74, %v68
    %v77 = vsel %vm75, 1, 0
    %v78 = vsel %vm76, 1, 0
    %v79 = vcvt.s32.f32 %v77
    %v80 = vcvt.s32.f32 %v78
    %v81 = vld [vmem:[%s4] sm:$0x1]
    %v82 = vld [vmem:[%s5] sm:$0x1]
    %v83 = vadd.f32 %v81, %v82
    %v84 = vld [vmem:[%s1] sm:$0xff]
    %v85 = vld [vmem:[%s1 + $0x8] sm:$0xff]
    %vm86 = vcmask 130048
    %v88 = vsel %vm86, %v79, 0
    %v91 = vsel %vm86, %v80, 0
    %93 = vmatprep.subr.mxu0 0.0
    %94 = vmatpush1.msra.mxu0 %v84
    %95 = vmatprep.subr.mxu0 0.0
    %96 = vmatpush1.msra.mxu0 %v85
    %97 = vmatprep.subr.mxu0 0.0
    %98 = vmatpush1.msra.mxu0 0.0
    %99 = vmatprep.subr.mxu0 0.0
    %100 = vmatpush1.msra.mxu0 0.0
    %101 = vmatprep.subr.mxu0 0.0
    %102 = vmatpush1.msra.mxu0 0.0
    %103 = vmatprep.subr.mxu0 0.0
    %104 = vmatpush1.msra.mxu0 0.0
    %105 = vmatprep.subr.mxu0 0.0
    %106 = vmatpush1.msra.mxu0 0.0
    %107 = vmatprep.subr.mxu0 0.0
    %108 = vmatpush1.msra.mxu0 0.0
    %109 = vmatprep.subr.mxu0 0.0
    %110 = vmatpush1.msra.mxu0 0.0
    %111 = vmatprep.subr.mxu0 0.0
    %112 = vmatpush1.msra.mxu0 0.0
    %113 = vmatprep.subr.mxu0 0.0
    %114 = vmatpush1.msra.mxu0 0.0
    %115 = vmatprep.subr.mxu0 0.0
    %116 = vmatpush1.msra.mxu0 0.0
    %117 = vmatprep.subr.mxu0 0.0
    %118 = vmatpush1.msra.mxu0 0.0
    %119 = vmatprep.subr.mxu0 0.0
    %120 = vmatpush1.msra.mxu0 0.0
    %121 = vmatprep.subr.mxu0 0.0
    %122 = vmatpush1.msra.mxu0 0.0
    %123 = vmatprep.subr.mxu0 0.0
    %124 = vmatpush1.msra.mxu0 0.0
    %125 = vmatprep.subr.mxu0 0.0
    %126 = vmatpush1.msra.mxu0 0.0
    %127 = vmatprep.subr.mxu0 0.0
    %128 = vmatpush1.msra.mxu0 0.0
    %129 = vmatprep.subr.mxu0 0.0
    %130 = vmatpush1.msra.mxu0 0.0
    %131 = vmatprep.subr.mxu0 0.0
    %132 = vmatpush1.msra.mxu0 0.0
    %133 = vmatprep.subr.mxu0 0.0
    %134 = vmatpush1.msra.mxu0 0.0
    %135 = vmatprep.subr.mxu0 0.0
    %136 = vmatpush1.msra.mxu0 0.0
    %137 = vmatprep.subr.mxu0 0.0
    %138 = vmatpush1.msra.mxu0 0.0
    %139 = vmatprep.subr.mxu0 0.0
    %140 = vmatpush1.msra.mxu0 0.0
    %141 = vmatprep.subr.mxu0 0.0
    %142 = vmatpush1.msra.mxu0 0.0
    %143 = vmatprep.subr.mxu0 0.0
    %144 = vmatpush1.msra.mxu0 0.0
    %145 = vmatprep.subr.mxu0 0.0
    %146 = vmatpush1.msra.mxu0 0.0
    %147 = vmatprep.subr.mxu0 0.0
    %148 = vmatpush1.msra.mxu0 0.0
    %149 = vmatprep.subr.mxu0 0.0
    %150 = vmatpush1.msra.mxu0 0.0
    %151 = vmatprep.subr.mxu0 0.0
    %152 = vmatpush1.msra.mxu0 0.0
    %153 = vmatprep.subr.mxu0 0.0
    %154 = vmatpush1.msra.mxu0 0.0
    %155 = vmatprep.subr.mxu0 0.0
    %156 = vmatpush1.msra.mxu0 0.0
    %157 = vmatprep.mubr.f32.mxu0 0.0
    %158 = vmatmul.mubr.f32.gmra.mrb[0].mxu0 %v88
    %v159 = vpop.f32.mrb[0].mxu0
    %v160 = vadd.f32 0.0, %v159
    %v161 = vpop.f32.mrb[0].mxu0
    %162 = vmatprep.mubr.f32.mxu0 0.0
    %163 = vmatmul.mubr.f32.gmra.mrb[0].mxu0 %v91
    %v164 = vpop.f32.mrb[0].mxu0
    %v165 = vadd.f32 0.0, %v164
    %v166 = vpop.f32.mrb[0].mxu0
    %167 = vdwg.mxu0
    %v168 = vld [vmem:[#allocation4] sm:$0xff]
    %v169 = vld [vmem:[#allocation4 + $0x8] sm:$0x1]
    %v171 = vlaneseq
    %v172 = vshrl.u32 %v171, 7
    %v173 = vsub.s32 0, %v172
    %v174 = vrot.slane %v83, %v173
    %vm176 = vcmask 72704
    %v178 = vsel %vm176, %v160, 0
    %v181 = vsel %vm176, %v165, 0
    %vm183 = vcmask 1040384
    %v185 = vsel %vm183, %v169, 0
    %187 = vmatprep.subr.mxu0 0.0
    %188 = vmatpush1.msra.mxu0 %v168
    %189 = vmatprep.subr.mxu0 0.0
    %190 = vmatpush1.msra.mxu0 %v185
    %191 = vmatprep.subr.mxu0 0.0
    %192 = vmatpush1.msra.mxu0 0.0
    %193 = vmatprep.subr.mxu0 0.0
    %194 = vmatpush1.msra.mxu0 0.0
    %195 = vmatprep.subr.mxu0 0.0
    %196 = vmatpush1.msra.mxu0 0.0
    %197 = vmatprep.subr.mxu0 0.0
    %198 = vmatpush1.msra.mxu0 0.0
    %199 = vmatprep.subr.mxu0 0.0
    %200 = vmatpush1.msra.mxu0 0.0
    %201 = vmatprep.subr.mxu0 0.0
    %202 = vmatpush1.msra.mxu0 0.0
    %203 = vmatprep.subr.mxu0 0.0
    %204 = vmatpush1.msra.mxu0 0.0
    %205 = vmatprep.subr.mxu0 0.0
    %206 = vmatpush1.msra.mxu0 0.0
    %207 = vmatprep.subr.mxu0 0.0
    %208 = vmatpush1.msra.mxu0 0.0
    %209 = vmatprep.subr.mxu0 0.0
    %210 = vmatpush1.msra.mxu0 0.0
    %211 = vmatprep.subr.mxu0 0.0
    %212 = vmatpush1.msra.mxu0 0.0
    %213 = vmatprep.subr.mxu0 0.0
    %214 = vmatpush1.msra.mxu0 0.0
    %215 = vmatprep.subr.mxu0 0.0
    %216 = vmatpush1.msra.mxu0 0.0
    %217 = vmatprep.subr.mxu0 0.0
    %218 = vmatpush1.msra.mxu0 0.0
    %219 = vmatprep.subr.mxu0 0.0
    %220 = vmatpush1.msra.mxu0 0.0
    %221 = vmatprep.subr.mxu0 0.0
    %222 = vmatpush1.msra.mxu0 0.0
    %223 = vmatprep.subr.mxu0 0.0
    %224 = vmatpush1.msra.mxu0 0.0
    %225 = vmatprep.subr.mxu0 0.0
    %226 = vmatpush1.msra.mxu0 0.0
    %227 = vmatprep.subr.mxu0 0.0
    %228 = vmatpush1.msra.mxu0 0.0
    %229 = vmatprep.subr.mxu0 0.0
    %230 = vmatpush1.msra.mxu0 0.0
    %231 = vmatprep.subr.mxu0 0.0
    %232 = vmatpush1.msra.mxu0 0.0
    %233 = vmatprep.subr.mxu0 0.0
    %234 = vmatpush1.msra.mxu0 0.0
    %235 = vmatprep.subr.mxu0 0.0
    %236 = vmatpush1.msra.mxu0 0.0
    %237 = vmatprep.subr.mxu0 0.0
    %238 = vmatpush1.msra.mxu0 0.0
    %239 = vmatprep.subr.mxu0 0.0
    %240 = vmatpush1.msra.mxu0 0.0
    %241 = vmatprep.subr.mxu0 0.0
    %242 = vmatpush1.msra.mxu0 0.0
    %243 = vmatprep.subr.mxu0 0.0
    %244 = vmatpush1.msra.mxu0 0.0
    %245 = vmatprep.subr.mxu0 0.0
    %246 = vmatpush1.msra.mxu0 0.0
    %247 = vmatprep.subr.mxu0 0.0
    %248 = vmatpush1.msra.mxu0 0.0
    %249 = vmatprep.subr.mxu0 0.0
    %250 = vmatpush1.msra.mxu0 0.0
    %251 = vmatprep.mubr.f32.mxu0 0.0
    %252 = vmatmul.mubr.f32.gmra.mrb[0].mxu0 %v178
    %v253 = vpop.f32.mrb[0].mxu0
    %v254 = vadd.f32 %v174, %v253
    %v255 = vpop.f32.mrb[0].mxu0
    %256 = vmatprep.mubr.f32.mxu0 0.0
    %257 = vmatmul.mubr.f32.gmra.mrb[0].mxu0 %v181
    %v258 = vpop.f32.mrb[0].mxu0
    %v259 = vadd.f32 %v174, %v258
    %v260 = vpop.f32.mrb[0].mxu0
    %261 = vdwg.mxu0
    %v262 = vld [vmem:[%s3] sm:$0xff]
    %v263 = vld [vmem:[%s3 + $0x8] sm:$0x1]
    %v265 = vsel %vm176, 0.0, 0
    %v268 = vsel %vm183, %v263, 0
    %270 = vmatprep.subr.mxu0 0.0
    %271 = vmatpush1.msra.mxu0 %v262
    %272 = vmatprep.subr.mxu0 0.0
    %273 = vmatpush1.msra.mxu0 %v268
    %274 = vmatprep.subr.mxu0 0.0
    %275 = vmatpush1.msra.mxu0 0.0
    %276 = vmatprep.subr.mxu0 0.0
    %277 = vmatpush1.msra.mxu0 0.0
    %278 = vmatprep.subr.mxu0 0.0
    %279 = vmatpush1.msra.mxu0 0.0
    %280 = vmatprep.subr.mxu0 0.0
    %281 = vmatpush1.msra.mxu0 0.0
    %282 = vmatprep.subr.mxu0 0.0
    %283 = vmatpush1.msra.mxu0 0.0
    %284 = vmatprep.subr.mxu0 0.0
    %285 = vmatpush1.msra.mxu0 0.0
    %286 = vmatprep.subr.mxu0 0.0
    %287 = vmatpush1.msra.mxu0 0.0
    %288 = vmatprep.subr.mxu0 0.0
    %289 = vmatpush1.msra.mxu0 0.0
    %290 = vmatprep.subr.mxu0 0.0
    %291 = vmatpush1.msra.mxu0 0.0
    %292 = vmatprep.subr.mxu0 0.0
    %293 = vmatpush1.msra.mxu0 0.0
    %294 = vmatprep.subr.mxu0 0.0
    %295 = vmatpush1.msra.mxu0 0.0
    %296 = vmatprep.subr.mxu0 0.0
    %297 = vmatpush1.msra.mxu0 0.0
    %298 = vmatprep.subr.mxu0 0.0
    %299 = vmatpush1.msra.mxu0 0.0
    %300 = vmatprep.subr.mxu0 0.0
    %301 = vmatpush1.msra.mxu0 0.0
    %302 = vmatprep.subr.mxu0 0.0
    %303 = vmatpush1.msra.mxu0 0.0
    %304 = vmatprep.subr.mxu0 0.0
    %305 = vmatpush1.msra.mxu0 0.0
    %306 = vmatprep.subr.mxu0 0.0
    %307 = vmatpush1.msra.mxu0 0.0
    %308 = vmatprep.subr.mxu0 0.0
    %309 = vmatpush1.msra.mxu0 0.0
    %310 = vmatprep.subr.mxu0 0.0
    %311 = vmatpush1.msra.mxu0 0.0
    %312 = vmatprep.subr.mxu0 0.0
    %313 = vmatpush1.msra.mxu0 0.0
    %314 = vmatprep.subr.mxu0 0.0
    %315 = vmatpush1.msra.mxu0 0.0
    %316 = vmatprep.subr.mxu0 0.0
    %317 = vmatpush1.msra.mxu0 0.0
    %318 = vmatprep.subr.mxu0 0.0
    %319 = vmatpush1.msra.mxu0 0.0
    %320 = vmatprep.subr.mxu0 0.0
    %321 = vmatpush1.msra.mxu0 0.0
    %322 = vmatprep.subr.mxu0 0.0
    %323 = vmatpush1.msra.mxu0 0.0
    %324 = vmatprep.subr.mxu0 0.0
    %325 = vmatpush1.msra.mxu0 0.0
    %326 = vmatprep.subr.mxu0 0.0
    %327 = vmatpush1.msra.mxu0 0.0
    %328 = vmatprep.subr.mxu0 0.0
    %329 = vmatpush1.msra.mxu0 0.0
    %330 = vmatprep.subr.mxu0 0.0
    %331 = vmatpush1.msra.mxu0 0.0
    %332 = vmatprep.subr.mxu0 0.0
    %333 = vmatpush1.msra.mxu0 0.0
    %334 = vmatprep.mubr.f32.mxu0 0.0
    %335 = vmatmul.mubr.f32.gmra.mrb[0].mxu0 %v265
    %v336 = vpop.f32.mrb[0].mxu0
    %v337 = vadd.f32 0.0, %v336
    %v338 = vpop.f32.mrb[0].mxu0
    %339 = vdwg.mxu0
    %v340 = vadd.f32 %v254, %v337
    %v341 = vtanh.pop %v340
    %vm342 = vcmask 66560
    %343 = vst.msk [vmem:[#allocation2] sm:$0x3] %vm342, %v341
    %v345 = vsel %vm176, %v341, 0
    %347 = vmatprep.subr.mxu0 0.0
    %348 = vmatpush1.msra.mxu0 %v262
    %349 = vmatprep.subr.mxu0 0.0
    %350 = vmatpush1.msra.mxu0 %v268
    %351 = vmatprep.subr.mxu0 0.0
    %352 = vmatpush1.msra.mxu0 0.0
    %353 = vmatprep.subr.mxu0 0.0
    %354 = vmatpush1.msra.mxu0 0.0
    %355 = vmatprep.subr.mxu0 0.0
    %356 = vmatpush1.msra.mxu0 0.0
    %357 = vmatprep.subr.mxu0 0.0
    %358 = vmatpush1.msra.mxu0 0.0
    %359 = vmatprep.subr.mxu0 0.0
    %360 = vmatpush1.msra.mxu0 0.0
    %361 = vmatprep.subr.mxu0 0.0
    %362 = vmatpush1.msra.mxu0 0.0
    %363 = vmatprep.subr.mxu0 0.0
    %364 = vmatpush1.msra.mxu0 0.0
    %365 = vmatprep.subr.mxu0 0.0
    %366 = vmatpush1.msra.mxu0 0.0
    %367 = vmatprep.subr.mxu0 0.0
    %368 = vmatpush1.msra.mxu0 0.0
    %369 = vmatprep.subr.mxu0 0.0
    %370 = vmatpush1.msra.mxu0 0.0
    %371 = vmatprep.subr.mxu0 0.0
    %372 = vmatpush1.msra.mxu0 0.0
    %373 = vmatprep.subr.mxu0 0.0
    %374 = vmatpush1.msra.mxu0 0.0
    %375 = vmatprep.subr.mxu0 0.0
    %376 = vmatpush1.msra.mxu0 0.0
    %377 = vmatprep.subr.mxu0 0.0
    %378 = vmatpush1.msra.mxu0 0.0
    %379 = vmatprep.subr.mxu0 0.0
    %380 = vmatpush1.msra.mxu0 0.0
    %381 = vmatprep.subr.mxu0 0.0
    %382 = vmatpush1.msra.mxu0 0.0
    %383 = vmatprep.subr.mxu0 0.0
    %384 = vmatpush1.msra.mxu0 0.0
    %385 = vmatprep.subr.mxu0 0.0
    %386 = vmatpush1.msra.mxu0 0.0
    %387 = vmatprep.subr.mxu0 0.0
    %388 = vmatpush1.msra.mxu0 0.0
    %389 = vmatprep.subr.mxu0 0.0
    %390 = vmatpush1.msra.mxu0 0.0
    %391 = vmatprep.subr.mxu0 0.0
    %392 = vmatpush1.msra.mxu0 0.0
    %393 = vmatprep.subr.mxu0 0.0
    %394 = vmatpush1.msra.mxu0 0.0
    %395 = vmatprep.subr.mxu0 0.0
    %396 = vmatpush1.msra.mxu0 0.0
    %397 = vmatprep.subr.mxu0 0.0
    %398 = vmatpush1.msra.mxu0 0.0
    %399 = vmatprep.subr.mxu0 0.0
    %400 = vmatpush1.msra.mxu0 0.0
    %401 = vmatprep.subr.mxu0 0.0
    %402 = vmatpush1.msra.mxu0 0.0
    %403 = vmatprep.subr.mxu0 0.0
    %404 = vmatpush1.msra.mxu0 0.0
    %405 = vmatprep.subr.mxu0 0.0
    %406 = vmatpush1.msra.mxu0 0.0
    %407 = vmatprep.subr.mxu0 0.0
    %408 = vmatpush1.msra.mxu0 0.0
    %409 = vmatprep.subr.mxu0 0.0
    %410 = vmatpush1.msra.mxu0 0.0
    %411 = vmatprep.mubr.f32.mxu0 0.0
    %412 = vmatmul.mubr.f32.gmra.mrb[0].mxu0 %v345
    %v413 = vpop.f32.mrb[0].mxu0
    %v414 = vadd.f32 0.0, %v413
    %v415 = vpop.f32.mrb[0].mxu0
    %416 = vdwg.mxu0
    %v418 = vrot.slane %v414, 6
    %v420 = vadd.f32 %v254, %v418
    %v421 = vtanh.pop %v420
    %s422 = scalar_lea.vmem [#allocation2], 2
    %vm423 = vcmask 68610
    %424 = vst.msk [vmem:[%s422 - $0x2] sm:$0xc] %vm423, %v421
    %v426 = vrot.slane %v421, 2
    %v427 = vsel %vm176, %v426, 0
    %429 = vmatprep.subr.mxu0 0.0
    %430 = vmatpush1.msra.mxu0 %v262
    %431 = vmatprep.subr.mxu0 0.0
    %432 = vmatpush1.msra.mxu0 %v268
    %433 = vmatprep.subr.mxu0 0.0
    %434 = vmatpush1.msra.mxu0 0.0
    %435 = vmatprep.subr.mxu0 0.0
    %436 = vmatpush1.msra.mxu0 0.0
    %437 = vmatprep.subr.mxu0 0.0
    %438 = vmatpush1.msra.mxu0 0.0
    %439 = vmatprep.subr.mxu0 0.0
    %440 = vmatpush1.msra.mxu0 0.0
    %441 = vmatprep.subr.mxu0 0.0
    %442 = vmatpush1.msra.mxu0 0.0
    %443 = vmatprep.subr.mxu0 0.0
    %444 = vmatpush1.msra.mxu0 0.0
    %445 = vmatprep.subr.mxu0 0.0
    %446 = vmatpush1.msra.mxu0 0.0
    %447 = vmatprep.subr.mxu0 0.0
    %448 = vmatpush1.msra.mxu0 0.0
    %449 = vmatprep.subr.mxu0 0.0
    %450 = vmatpush1.msra.mxu0 0.0
    %451 = vmatprep.subr.mxu0 0.0
    %452 = vmatpush1.msra.mxu0 0.0
    %453 = vmatprep.subr.mxu0 0.0
    %454 = vmatpush1.msra.mxu0 0.0
    %455 = vmatprep.subr.mxu0 0.0
    %456 = vmatpush1.msra.mxu0 0.0
    %457 = vmatprep.subr.mxu0 0.0
    %458 = vmatpush1.msra.mxu0 0.0
    %459 = vmatprep.subr.mxu0 0.0
    %460 = vmatpush1.msra.mxu0 0.0
    %461 = vmatprep.subr.mxu0 0.0
    %462 = vmatpush1.msra.mxu0 0.0
    %463 = vmatprep.subr.mxu0 0.0
    %464 = vmatpush1.msra.mxu0 0.0
    %465 = vmatprep.subr.mxu0 0.0
    %466 = vmatpush1.msra.mxu0 0.0
    %467 = vmatprep.subr.mxu0 0.0
    %468 = vmatpush1.msra.mxu0 0.0
    %469 = vmatprep.subr.mxu0 0.0
    %470 = vmatpush1.msra.mxu0 0.0
    %471 = vmatprep.subr.mxu0 0.0
    %472 = vmatpush1.msra.mxu0 0.0
    %473 = vmatprep.subr.mxu0 0.0
    %474 = vmatpush1.msra.mxu0 0.0
    %475 = vmatprep.subr.mxu0 0.0
    %476 = vmatpush1.msra.mxu0 0.0
    %477 = vmatprep.subr.mxu0 0.0
    %478 = vmatpush1.msra.mxu0 0.0
    %479 = vmatprep.subr.mxu0 0.0
    %480 = vmatpush1.msra.mxu0 0.0
    %481 = vmatprep.subr.mxu0 0.0
    %482 = vmatpush1.msra.mxu0 0.0
    %483 = vmatprep.subr.mxu0 0.0
    %484 = vmatpush1.msra.mxu0 0.0
    %485 = vmatprep.subr.mxu0 0.0
    %486 = vmatpush1.msra.mxu0 0.0
    %487 = vmatprep.subr.mxu0 0.0
    %488 = vmatpush1.msra.mxu0 0.0
    %489 = vmatprep.subr.mxu0 0.0
    %490 = vmatpush1.msra.mxu0 0.0
    %491 = vmatprep.subr.mxu0 0.0
    %492 = vmatpush1.msra.mxu0 0.0
    %493 = vmatprep.mubr.f32.mxu0 0.0
    %494 = vmatmul.mubr.f32.gmra.mrb[0].mxu0 %v427
    %v495 = vpop.f32.mrb[0].mxu0
    %v496 = vadd.f32 0.0, %v495
    %v497 = vpop.f32.mrb[0].mxu0
    %498 = vdwg.mxu0
    %v500 = vrot.slane %v496, 4
    %v502 = vadd.f32 %v254, %v500
    %v503 = vtanh.pop %v502
    %s504 = scalar_lea.vmem [#allocation2], 4
    %vm505 = vcmask 70660
    %506 = vst.msk [vmem:[%s504 - $0x4] sm:$0x30] %vm505, %v503
    %v508 = vrot.slane %v503, 4
    %v509 = vsel %vm176, %v508, 0
    %511 = vmatprep.subr.mxu0 0.0
    %512 = vmatpush1.msra.mxu0 %v262
    %513 = vmatprep.subr.mxu0 0.0
    %514 = vmatpush1.msra.mxu0 %v268
    %515 = vmatprep.subr.mxu0 0.0
    %516 = vmatpush1.msra.mxu0 0.0
    %517 = vmatprep.subr.mxu0 0.0
    %518 = vmatpush1.msra.mxu0 0.0
    %519 = vmatprep.subr.mxu0 0.0
    %520 = vmatpush1.msra.mxu0 0.0
    %521 = vmatprep.subr.mxu0 0.0
    %522 = vmatpush1.msra.mxu0 0.0
    %523 = vmatprep.subr.mxu0 0.0
    %524 = vmatpush1.msra.mxu0 0.0
    %525 = vmatprep.subr.mxu0 0.0
    %526 = vmatpush1.msra.mxu0 0.0
    %527 = vmatprep.subr.mxu0 0.0
    %528 = vmatpush1.msra.mxu0 0.0
    %529 = vmatprep.subr.mxu0 0.0
    %530 = vmatpush1.msra.mxu0 0.0
    %531 = vmatprep.subr.mxu0 0.0
    %532 = vmatpush1.msra.mxu0 0.0
    %533 = vmatprep.subr.mxu0 0.0
    %534 = vmatpush1.msra.mxu0 0.0
    %535 = vmatprep.subr.mxu0 0.0
    %536 = vmatpush1.msra.mxu0 0.0
    %537 = vmatprep.subr.mxu0 0.0
    %538 = vmatpush1.msra.mxu0 0.0
    %539 = vmatprep.subr.mxu0 0.0
    %540 = vmatpush1.msra.mxu0 0.0
    %541 = vmatprep.subr.mxu0 0.0
    %542 = vmatpush1.msra.mxu0 0.0
    %543 = vmatprep.subr.mxu0 0.0
    %544 = vmatpush1.msra.mxu0 0.0
    %545 = vmatprep.subr.mxu0 0.0
    %546 = vmatpush1.msra.mxu0 0.0
    %547 = vmatprep.subr.mxu0 0.0
    %548 = vmatpush1.msra.mxu0 0.0
    %549 = vmatprep.subr.mxu0 0.0
    %550 = vmatpush1.msra.mxu0 0.0
    %551 = vmatprep.subr.mxu0 0.0
    %552 = vmatpush1.msra.mxu0 0.0
    %553 = vmatprep.subr.mxu0 0.0
    %554 = vmatpush1.msra.mxu0 0.0
    %555 = vmatprep.subr.mxu0 0.0
    %556 = vmatpush1.msra.mxu0 0.0
    %557 = vmatprep.subr.mxu0 0.0
    %558 = vmatpush1.msra.mxu0 0.0
    %559 = vmatprep.subr.mxu0 0.0
    %560 = vmatpush1.msra.mxu0 0.0
    %561 = vmatprep.subr.mxu0 0.0
    %562 = vmatpush1.msra.mxu0 0.0
    %563 = vmatprep.subr.mxu0 0.0
    %564 = vmatpush1.msra.mxu0 0.0
    %565 = vmatprep.subr.mxu0 0.0
    %566 = vmatpush1.msra.mxu0 0.0
    %567 = vmatprep.subr.mxu0 0.0
    %568 = vmatpush1.msra.mxu0 0.0
    %569 = vmatprep.subr.mxu0 0.0
    %570 = vmatpush1.msra.mxu0 0.0
    %571 = vmatprep.subr.mxu0 0.0
    %572 = vmatpush1.msra.mxu0 0.0
    %573 = vmatprep.subr.mxu0 0.0
    %574 = vmatpush1.msra.mxu0 0.0
    %575 = vmatprep.mubr.f32.mxu0 0.0
    %576 = vmatmul.mubr.f32.gmra.mrb[0].mxu0 %v509
    %v577 = vpop.f32.mrb[0].mxu0
    %v578 = vadd.f32 0.0, %v577
    %v579 = vpop.f32.mrb[0].mxu0
    %580 = vdwg.mxu0
    %v582 = vrot.slane %v578, 2
    %v584 = vadd.f32 %v254, %v582
    %v585 = vtanh.pop %v584
    %s586 = scalar_lea.vmem [#allocation2], 6
    %vm587 = vcmask 72710
    %588 = vst.msk [vmem:[%s586 - $0x6] sm:$0xc0] %vm587, %v585
    %v590 = vrot.slane %v585, 6
    %v591 = vsel %vm176, %v590, 0
    %593 = vmatprep.subr.mxu0 0.0
    %594 = vmatpush1.msra.mxu0 %v262
    %595 = vmatprep.subr.mxu0 0.0
    %596 = vmatpush1.msra.mxu0 %v268
    %597 = vmatprep.subr.mxu0 0.0
    %598 = vmatpush1.msra.mxu0 0.0
    %599 = vmatprep.subr.mxu0 0.0
    %600 = vmatpush1.msra.mxu0 0.0
    %601 = vmatprep.subr.mxu0 0.0
    %602 = vmatpush1.msra.mxu0 0.0
    %603 = vmatprep.subr.mxu0 0.0
    %604 = vmatpush1.msra.mxu0 0.0
    %605 = vmatprep.subr.mxu0 0.0
    %606 = vmatpush1.msra.mxu0 0.0
    %607 = vmatprep.subr.mxu0 0.0
    %608 = vmatpush1.msra.mxu0 0.0
    %609 = vmatprep.subr.mxu0 0.0
    %610 = vmatpush1.msra.mxu0 0.0
    %611 = vmatprep.subr.mxu0 0.0
    %612 = vmatpush1.msra.mxu0 0.0
    %613 = vmatprep.subr.mxu0 0.0
    %614 = vmatpush1.msra.mxu0 0.0
    %615 = vmatprep.subr.mxu0 0.0
    %616 = vmatpush1.msra.mxu0 0.0
    %617 = vmatprep.subr.mxu0 0.0
    %618 = vmatpush1.msra.mxu0 0.0
    %619 = vmatprep.subr.mxu0 0.0
    %620 = vmatpush1.msra.mxu0 0.0
    %621 = vmatprep.subr.mxu0 0.0
    %622 = vmatpush1.msra.mxu0 0.0
    %623 = vmatprep.subr.mxu0 0.0
    %624 = vmatpush1.msra.mxu0 0.0
    %625 = vmatprep.subr.mxu0 0.0
    %626 = vmatpush1.msra.mxu0 0.0
    %627 = vmatprep.subr.mxu0 0.0
    %628 = vmatpush1.msra.mxu0 0.0
    %629 = vmatprep.subr.mxu0 0.0
    %630 = vmatpush1.msra.mxu0 0.0
    %631 = vmatprep.subr.mxu0 0.0
    %632 = vmatpush1.msra.mxu0 0.0
    %633 = vmatprep.subr.mxu0 0.0
    %634 = vmatpush1.msra.mxu0 0.0
    %635 = vmatprep.subr.mxu0 0.0
    %636 = vmatpush1.msra.mxu0 0.0
    %637 = vmatprep.subr.mxu0 0.0
    %638 = vmatpush1.msra.mxu0 0.0
    %639 = vmatprep.subr.mxu0 0.0
    %640 = vmatpush1.msra.mxu0 0.0
    %641 = vmatprep.subr.mxu0 0.0
    %642 = vmatpush1.msra.mxu0 0.0
    %643 = vmatprep.subr.mxu0 0.0
    %644 = vmatpush1.msra.mxu0 0.0
    %645 = vmatprep.subr.mxu0 0.0
    %646 = vmatpush1.msra.mxu0 0.0
    %647 = vmatprep.subr.mxu0 0.0
    %648 = vmatpush1.msra.mxu0 0.0
    %649 = vmatprep.subr.mxu0 0.0
    %650 = vmatpush1.msra.mxu0 0.0
    %651 = vmatprep.subr.mxu0 0.0
    %652 = vmatpush1.msra.mxu0 0.0
    %653 = vmatprep.subr.mxu0 0.0
    %654 = vmatpush1.msra.mxu0 0.0
    %655 = vmatprep.subr.mxu0 0.0
    %656 = vmatpush1.msra.mxu0 0.0
    %657 = vmatprep.mubr.f32.mxu0 0.0
    %658 = vmatmul.mubr.f32.gmra.mrb[0].mxu0 %v591
    %v659 = vpop.f32.mrb[0].mxu0
    %v660 = vadd.f32 0.0, %v659
    %v661 = vpop.f32.mrb[0].mxu0
    %662 = vdwg.mxu0
    %v663 = vadd.f32 %v259, %v660
    %v664 = vtanh.pop %v663
    %s665 = scalar_lea.vmem [#allocation2], 8
    %666 = vst.msk [vmem:[%s665] sm:$0x3] %vm342, %v664
    %v668 = vsel %vm176, %v664, 0
    %670 = vmatprep.subr.mxu0 0.0
    %671 = vmatpush1.msra.mxu0 %v262
    %672 = vmatprep.subr.mxu0 0.0
    %673 = vmatpush1.msra.mxu0 %v268
    %674 = vmatprep.subr.mxu0 0.0
    %675 = vmatpush1.msra.mxu0 0.0
    %676 = vmatprep.subr.mxu0 0.0
    %677 = vmatpush1.msra.mxu0 0.0
    %678 = vmatprep.subr.mxu0 0.0
    %679 = vmatpush1.msra.mxu0 0.0
    %680 = vmatprep.subr.mxu0 0.0
    %681 = vmatpush1.msra.mxu0 0.0
    %682 = vmatprep.subr.mxu0 0.0
    %683 = vmatpush1.msra.mxu0 0.0
    %684 = vmatprep.subr.mxu0 0.0
    %685 = vmatpush1.msra.mxu0 0.0
    %686 = vmatprep.subr.mxu0 0.0
    %687 = vmatpush1.msra.mxu0 0.0
    %688 = vmatprep.subr.mxu0 0.0
    %689 = vmatpush1.msra.mxu0 0.0
    %690 = vmatprep.subr.mxu0 0.0
    %691 = vmatpush1.msra.mxu0 0.0
    %692 = vmatprep.subr.mxu0 0.0
    %693 = vmatpush1.msra.mxu0 0.0
    %694 = vmatprep.subr.mxu0 0.0
    %695 = vmatpush1.msra.mxu0 0.0
    %696 = vmatprep.subr.mxu0 0.0
    %697 = vmatpush1.msra.mxu0 0.0
    %698 = vmatprep.subr.mxu0 0.0
    %699 = vmatpush1.msra.mxu0 0.0
    %700 = vmatprep.subr.mxu0 0.0
    %701 = vmatpush1.msra.mxu0 0.0
    %702 = vmatprep.subr.mxu0 0.0
    %703 = vmatpush1.msra.mxu0 0.0
    %704 = vmatprep.subr.mxu0 0.0
    %705 = vmatpush1.msra.mxu0 0.0
    %706 = vmatprep.subr.mxu0 0.0
    %707 = vmatpush1.msra.mxu0 0.0
    %708 = vmatprep.subr.mxu0 0.0
    %709 = vmatpush1.msra.mxu0 0.0
    %710 = vmatprep.subr.mxu0 0.0
    %711 = vmatpush1.msra.mxu0 0.0
    %712 = vmatprep.subr.mxu0 0.0
    %713 = vmatpush1.msra.mxu0 0.0
    %714 = vmatprep.subr.mxu0 0.0
    %715 = vmatpush1.msra.mxu0 0.0
    %716 = vmatprep.subr.mxu0 0.0
    %717 = vmatpush1.msra.mxu0 0.0
    %718 = vmatprep.subr.mxu0 0.0
    %719 = vmatpush1.msra.mxu0 0.0
    %720 = vmatprep.subr.mxu0 0.0
    %721 = vmatpush1.msra.mxu0 0.0
    %722 = vmatprep.subr.mxu0 0.0
    %723 = vmatpush1.msra.mxu0 0.0
    %724 = vmatprep.subr.mxu0 0.0
    %725 = vmatpush1.msra.mxu0 0.0
    %726 = vmatprep.subr.mxu0 0.0
    %727 = vmatpush1.msra.mxu0 0.0
    %728 = vmatprep.subr.mxu0 0.0
    %729 = vmatpush1.msra.mxu0 0.0
    %730 = vmatprep.subr.mxu0 0.0
    %731 = vmatpush1.msra.mxu0 0.0
    %732 = vmatprep.subr.mxu0 0.0
    %733 = vmatpush1.msra.mxu0 0.0
    %734 = vmatprep.mubr.f32.mxu0 0.0
    %735 = vmatmul.mubr.f32.gmra.mrb[0].mxu0 %v668
    %v736 = vpop.f32.mrb[0].mxu0
    %v737 = vadd.f32 0.0, %v736
    %v738 = vpop.f32.mrb[0].mxu0
    %739 = vdwg.mxu0
    %v741 = vrot.slane %v737, 6
    %v743 = vadd.f32 %v259, %v741
    %v744 = vtanh.pop %v743
    %s745 = scalar_lea.vmem [#allocation2], 10
    %746 = vst.msk [vmem:[%s745 - $0x2] sm:$0xc] %vm423, %v744
    %v748 = vrot.slane %v744, 2
    %v749 = vsel %vm176, %v748, 0
    %751 = vmatprep.subr.mxu0 0.0
    %752 = vmatpush1.msra.mxu0 %v262
    %753 = vmatprep.subr.mxu0 0.0
    %754 = vmatpush1.msra.mxu0 %v268
    %755 = vmatprep.subr.mxu0 0.0
    %756 = vmatpush1.msra.mxu0 0.0
    %757 = vmatprep.subr.mxu0 0.0
    %758 = vmatpush1.msra.mxu0 0.0
    %759 = vmatprep.subr.mxu0 0.0
    %760 = vmatpush1.msra.mxu0 0.0
    %761 = vmatprep.subr.mxu0 0.0
    %762 = vmatpush1.msra.mxu0 0.0
    %763 = vmatprep.subr.mxu0 0.0
    %764 = vmatpush1.msra.mxu0 0.0
    %765 = vmatprep.subr.mxu0 0.0
    %766 = vmatpush1.msra.mxu0 0.0
    %767 = vmatprep.subr.mxu0 0.0
    %768 = vmatpush1.msra.mxu0 0.0
    %769 = vmatprep.subr.mxu0 0.0
    %770 = vmatpush1.msra.mxu0 0.0
    %771 = vmatprep.subr.mxu0 0.0
    %772 = vmatpush1.msra.mxu0 0.0
    %773 = vmatprep.subr.mxu0 0.0
    %774 = vmatpush1.msra.mxu0 0.0
    %775 = vmatprep.subr.mxu0 0.0
    %776 = vmatpush1.msra.mxu0 0.0
    %777 = vmatprep.subr.mxu0 0.0
    %778 = vmatpush1.msra.mxu0 0.0
    %779 = vmatprep.subr.mxu0 0.0
    %780 = vmatpush1.msra.mxu0 0.0
    %781 = vmatprep.subr.mxu0 0.0
    %782 = vmatpush1.msra.mxu0 0.0
    %783 = vmatprep.subr.mxu0 0.0
    %784 = vmatpush1.msra.mxu0 0.0
    %785 = vmatprep.subr.mxu0 0.0
    %786 = vmatpush1.msra.mxu0 0.0
    %787 = vmatprep.subr.mxu0 0.0
    %788 = vmatpush1.msra.mxu0 0.0
    %789 = vmatprep.subr.mxu0 0.0
    %790 = vmatpush1.msra.mxu0 0.0
    %791 = vmatprep.subr.mxu0 0.0
    %792 = vmatpush1.msra.mxu0 0.0
    %793 = vmatprep.subr.mxu0 0.0
    %794 = vmatpush1.msra.mxu0 0.0
    %795 = vmatprep.subr.mxu0 0.0
    %796 = vmatpush1.msra.mxu0 0.0
    %797 = vmatprep.subr.mxu0 0.0
    %798 = vmatpush1.msra.mxu0 0.0
    %799 = vmatprep.subr.mxu0 0.0
    %800 = vmatpush1.msra.mxu0 0.0
    %801 = vmatprep.subr.mxu0 0.0
    %802 = vmatpush1.msra.mxu0 0.0
    %803 = vmatprep.subr.mxu0 0.0
    %804 = vmatpush1.msra.mxu0 0.0
    %805 = vmatprep.subr.mxu0 0.0
    %806 = vmatpush1.msra.mxu0 0.0
    %807 = vmatprep.subr.mxu0 0.0
    %808 = vmatpush1.msra.mxu0 0.0
    %809 = vmatprep.subr.mxu0 0.0
    %810 = vmatpush1.msra.mxu0 0.0
    %811 = vmatprep.subr.mxu0 0.0
    %812 = vmatpush1.msra.mxu0 0.0
    %813 = vmatprep.subr.mxu0 0.0
    %814 = vmatpush1.msra.mxu0 0.0
    %815 = vmatprep.mubr.f32.mxu0 0.0
    %816 = vmatmul.mubr.f32.gmra.mrb[0].mxu0 %v749
    %v817 = vpop.f32.mrb[0].mxu0
    %v818 = vadd.f32 0.0, %v817
    %v819 = vpop.f32.mrb[0].mxu0
    %820 = vdwg.mxu0
    %v822 = vrot.slane %v818, 4
    %v824 = vadd.f32 %v259, %v822
    %v825 = vtanh.pop %v824
    %s826 = scalar_lea.vmem [#allocation2], 12
    %827 = vst.msk [vmem:[%s826 - $0x4] sm:$0x30] %vm505, %v825
    %v829 = vrot.slane %v825, 4
    %v830 = vsel %vm176, %v829, 0
    %832 = vmatprep.subr.mxu0 0.0
    %833 = vmatpush1.msra.mxu0 %v262
    %834 = vmatprep.subr.mxu0 0.0
    %835 = vmatpush1.msra.mxu0 %v268
    %836 = vmatprep.subr.mxu0 0.0
    %837 = vmatpush1.msra.mxu0 0.0
    %838 = vmatprep.subr.mxu0 0.0
    %839 = vmatpush1.msra.mxu0 0.0
    %840 = vmatprep.subr.mxu0 0.0
    %841 = vmatpush1.msra.mxu0 0.0
    %842 = vmatprep.subr.mxu0 0.0
    %843 = vmatpush1.msra.mxu0 0.0
    %844 = vmatprep.subr.mxu0 0.0
    %845 = vmatpush1.msra.mxu0 0.0
    %846 = vmatprep.subr.mxu0 0.0
    %847 = vmatpush1.msra.mxu0 0.0
    %848 = vmatprep.subr.mxu0 0.0
    %849 = vmatpush1.msra.mxu0 0.0
    %850 = vmatprep.subr.mxu0 0.0
    %851 = vmatpush1.msra.mxu0 0.0
    %852 = vmatprep.subr.mxu0 0.0
    %853 = vmatpush1.msra.mxu0 0.0
    %854 = vmatprep.subr.mxu0 0.0
    %855 = vmatpush1.msra.mxu0 0.0
    %856 = vmatprep.subr.mxu0 0.0
    %857 = vmatpush1.msra.mxu0 0.0
    %858 = vmatprep.subr.mxu0 0.0
    %859 = vmatpush1.msra.mxu0 0.0
    %860 = vmatprep.subr.mxu0 0.0
    %861 = vmatpush1.msra.mxu0 0.0
    %862 = vmatprep.subr.mxu0 0.0
    %863 = vmatpush1.msra.mxu0 0.0
    %864 = vmatprep.subr.mxu0 0.0
    %865 = vmatpush1.msra.mxu0 0.0
    %866 = vmatprep.subr.mxu0 0.0
    %867 = vmatpush1.msra.mxu0 0.0
    %868 = vmatprep.subr.mxu0 0.0
    %869 = vmatpush1.msra.mxu0 0.0
    %870 = vmatprep.subr.mxu0 0.0
    %871 = vmatpush1.msra.mxu0 0.0
    %872 = vmatprep.subr.mxu0 0.0
    %873 = vmatpush1.msra.mxu0 0.0
    %874 = vmatprep.subr.mxu0 0.0
    %875 = vmatpush1.msra.mxu0 0.0
    %876 = vmatprep.subr.mxu0 0.0
    %877 = vmatpush1.msra.mxu0 0.0
    %878 = vmatprep.subr.mxu0 0.0
    %879 = vmatpush1.msra.mxu0 0.0
    %880 = vmatprep.subr.mxu0 0.0
    %881 = vmatpush1.msra.mxu0 0.0
    %882 = vmatprep.subr.mxu0 0.0
    %883 = vmatpush1.msra.mxu0 0.0
    %884 = vmatprep.subr.mxu0 0.0
    %885 = vmatpush1.msra.mxu0 0.0
    %886 = vmatprep.subr.mxu0 0.0
    %887 = vmatpush1.msra.mxu0 0.0
    %888 = vmatprep.subr.mxu0 0.0
    %889 = vmatpush1.msra.mxu0 0.0
    %890 = vmatprep.subr.mxu0 0.0
    %891 = vmatpush1.msra.mxu0 0.0
    %892 = vmatprep.subr.mxu0 0.0
    %893 = vmatpush1.msra.mxu0 0.0
    %894 = vmatprep.subr.mxu0 0.0
    %895 = vmatpush1.msra.mxu0 0.0
    %896 = vmatprep.mubr.f32.mxu0 0.0
    %897 = vmatmul.mubr.f32.gmra.mrb[0].mxu0 %v830
    %v898 = vpop.f32.mrb[0].mxu0
    %v899 = vadd.f32 0.0, %v898
    %v900 = vpop.f32.mrb[0].mxu0
    %901 = vdwg.mxu0
    %v903 = vrot.slane %v899, 2
    %v905 = vadd.f32 %v259, %v903
    %v906 = vtanh.pop %v905
    %s907 = scalar_lea.vmem [#allocation2], 14
    %908 = vst.msk [vmem:[%s907 - $0x6] sm:$0xc0] %vm587, %v906
    %v909 = vld [vmem:[#allocation2] sm:$0x3]
    %v910 = vld [vmem:[#allocation2 + $0x2] sm:$0x3]
    %v911 = vld [vmem:[#allocation2 + $0x4] sm:$0x3]
    %v912 = vld [vmem:[#allocation2 + $0x6] sm:$0x3]
    %v913 = vld [vmem:[#allocation2 + $0x8] sm:$0x3]
    %v914 = vld [vmem:[#allocation2 + $0xa] sm:$0x3]
    %v915 = vld [vmem:[#allocation2 + $0xc] sm:$0x3]
    %v916 = vld [vmem:[#allocation2 + $0xe] sm:$0x3]
    %v917 = vld [vmem:[%s6] sm:$0x1]
    %v919 = vlaneseq
    %v920 = vshrl.u32 %v919, 7
    %v921 = vsub.s32 0, %v920
    %v922 = vrot.slane %v917, %v921
    %v924 = vmul.f32 %v909, %v922
    %v925 = vmul.f32 %v910, %v922
    %v926 = vmul.f32 %v911, %v922
    %v927 = vmul.f32 %v912, %v922
    %v928 = vmul.f32 %v913, %v922
    %v929 = vmul.f32 %v914, %v922
    %v930 = vmul.f32 %v915, %v922
    %v931 = vmul.f32 %v916, %v922
    %v932 = vsel %vm342, %v924, 0.0
    %933 = vadd.xlane.f32.xlu0 %v932
    %v934 = vpop.xlane.xlu0 %933
    %v935 = vsel %vm342, %v925, 0.0
    %936 = vadd.xlane.f32.xlu0 %v935
    %v937 = vpop.xlane.xlu0 %936
    %v938 = vsel %vm342, %v926, 0.0
    %939 = vadd.xlane.f32.xlu0 %v938
    %v940 = vpop.xlane.xlu0 %939
    %v941 = vsel %vm342, %v927, 0.0
    %942 = vadd.xlane.f32.xlu0 %v941
    %v943 = vpop.xlane.xlu0 %942
    %v944 = vsel %vm342, %v928, 0.0
    %945 = vadd.xlane.f32.xlu0 %v944
    %v946 = vpop.xlane.xlu0 %945
    %v947 = vsel %vm342, %v929, 0.0
    %948 = vadd.xlane.f32.xlu0 %v947
    %v949 = vpop.xlane.xlu0 %948
    %v950 = vsel %vm342, %v930, 0.0
    %951 = vadd.xlane.f32.xlu0 %v950
    %v952 = vpop.xlane.xlu0 %951
    %v953 = vsel %vm342, %v931, 0.0
    %954 = vadd.xlane.f32.xlu0 %v953
    %v955 = vpop.xlane.xlu0 %954
    %s956 = sld [smem:[#allocation3]]
    %v957 = vstv %s956
    %v958 = vadd.f32 %v934, %v957
    %v959 = vadd.f32 %v937, %v957
    %v960 = vadd.f32 %v940, %v957
    %v961 = vadd.f32 %v943, %v957
    %v962 = vadd.f32 %v946, %v957
    %v963 = vadd.f32 %v949, %v957
    %v964 = vadd.f32 %v952, %v957
    %v965 = vadd.f32 %v955, %v957
    %vm966 = vcmask 1041408
    %v967 = vsel %vm966, %v958, -inf
    %v968 = vsel %vm966, %v959, -inf
    %v969 = vsel %vm966, %v960, -inf
    %v970 = vsel %vm966, %v961, -inf
    %v971 = vsel %vm966, %v962, -inf
    %v972 = vmax.f32 %v967, %v971
    %v973 = vsel %vm966, %v963, -inf
    %v974 = vmax.f32 %v968, %v973
    %v975 = vsel %vm966, %v964, -inf
    %v976 = vmax.f32 %v969, %v975
    %v977 = vsel %vm966, %v965, -inf
    %v978 = vmax.f32 %v970, %v977
    %v979 = vmax.f32 %v972, %v974
    %v980 = vmax.f32 %v976, %v978
    %v981 = vmax.f32 %v979, %v980
    %v982 = vsub.f32 %v958, %v981
    %v983 = vsub.f32 %v959, %v981
    %v984 = vsub.f32 %v960, %v981
    %v985 = vsub.f32 %v961, %v981
    %v986 = vsub.f32 %v962, %v981
    %v987 = vsub.f32 %v963, %v981
    %v988 = vsub.f32 %v964, %v981
    %v989 = vsub.f32 %v965, %v981
    %v990 = vmul.f32 %v982, 1.442695
    %v991 = vpow.pop %v990
    %v992 = vmul.f32 %v983, 1.442695
    %v993 = vpow.pop %v992
    %v994 = vmul.f32 %v984, 1.442695
    %v995 = vpow.pop %v994
    %v996 = vmul.f32 %v985, 1.442695
    %v997 = vpow.pop %v996
    %v998 = vmul.f32 %v986, 1.442695
    %v999 = vpow.pop %v998
    %v1000 = vmul.f32 %v987, 1.442695
    %v1001 = vpow.pop %v1000
    %v1002 = vmul.f32 %v988, 1.442695
    %v1003 = vpow.pop %v1002
    %v1004 = vmul.f32 %v989, 1.442695
    %v1005 = vpow.pop %v1004
    %v1006 = vsel %vm966, %v991, 0.0
    %v1007 = vsel %vm966, %v993, 0.0
    %v1008 = vadd.f32 %v1006, %v1007
    %v1009 = vsel %vm966, %v995, 0.0
    %v1010 = vadd.f32 %v1008, %v1009
    %v1011 = vsel %vm966, %v997, 0.0
    %v1012 = vadd.f32 %v1010, %v1011
    %v1013 = vsel %vm966, %v999, 0.0
    %v1014 = vadd.f32 %v1012, %v1013
    %v1015 = vsel %vm966, %v1001, 0.0
    %v1016 = vadd.f32 %v1014, %v1015
    %v1017 = vsel %vm966, %v1003, 0.0
    %v1018 = vadd.f32 %v1016, %v1017
    %v1019 = vsel %vm966, %v1005, 0.0
    %v1020 = vadd.f32 %v1018, %v1019
    %v1021 = vrcp.pop %v1020
    %v1022 = vmul.f32 %v991, %v1021
    %v1023 = vmul.f32 %v993, %v1021
    %v1024 = vmul.f32 %v995, %v1021
    %v1025 = vmul.f32 %v997, %v1021
    %v1026 = vmul.f32 %v999, %v1021
    %v1027 = vmul.f32 %v1001, %v1021
    %v1028 = vmul.f32 %v1003, %v1021
    %v1029 = vmul.f32 %v1005, %v1021
    %v1030 = vmul.f32 %v909, %v1022
    %v1031 = vmul.f32 %v910, %v1023
    %v1032 = vmul.f32 %v911, %v1024
    %v1033 = vmul.f32 %v912, %v1025
    %v1034 = vmul.f32 %v913, %v1026
    %v1035 = vmul.f32 %v914, %v1027
    %v1036 = vmul.f32 %v915, %v1028
    %v1037 = vmul.f32 %v916, %v1029
    %v1038 = vsel %vm342, %v1030, 0.0
    %v1039 = vsel %vm342, %v1031, 0.0
    %v1040 = vadd.f32 %v1038, %v1039
    %v1041 = vsel %vm342, %v1032, 0.0
    %v1042 = vadd.f32 %v1040, %v1041
    %v1043 = vsel %vm342, %v1033, 0.0
    %v1044 = vadd.f32 %v1042, %v1043
    %v1045 = vsel %vm342, %v1034, 0.0
    %v1046 = vadd.f32 %v1044, %v1045
    %v1047 = vsel %vm342, %v1035, 0.0
    %v1048 = vadd.f32 %v1046, %v1047
    %v1049 = vsel %vm342, %v1036, 0.0
    %v1050 = vadd.f32 %v1048, %v1049
    %v1051 = vsel %vm342, %v1037, 0.0
    %v1052 = vadd.f32 %v1050, %v1051
    %v1053 = vld [vmem:[#allocation7] sm:$0xff]
    %v1054 = vld [vmem:[#allocation7 + $0x8] sm:$0x1]
    %v1055 = vld [vmem:[%s9] sm:$0x1]
    %v1057 = vlaneseq
    %v1058 = vshrl.u32 %v1057, 7
    %v1059 = vsub.s32 0, %v1058
    %v1060 = vrot.slane %v1055, %v1059
    %v1063 = vsel %vm176, %v1052, 0
    %v1066 = vsel %vm183, %v1054, 0
    %1068 = vmatprep.subr.mxu0 0.0
    %1069 = vmatpush1.msra.mxu0 %v1053
    %1070 = vmatprep.subr.mxu0 0.0
    %1071 = vmatpush1.msra.mxu0 %v1066
    %1072 = vmatprep.subr.mxu0 0.0
    %1073 = vmatpush1.msra.mxu0 0.0
    %1074 = vmatprep.subr.mxu0 0.0
    %1075 = vmatpush1.msra.mxu0 0.0
    %1076 = vmatprep.subr.mxu0 0.0
    %1077 = vmatpush1.msra.mxu0 0.0
    %1078 = vmatprep.subr.mxu0 0.0
    %1079 = vmatpush1.msra.mxu0 0.0
    %1080 = vmatprep.subr.mxu0 0.0
    %1081 = vmatpush1.msra.mxu0 0.0
    %1082 = vmatprep.subr.mxu0 0.0
    %1083 = vmatpush1.msra.mxu0 0.0
    %1084 = vmatprep.subr.mxu0 0.0
    %1085 = vmatpush1.msra.mxu0 0.0
    %1086 = vmatprep.subr.mxu0 0.0
    %1087 = vmatpush1.msra.mxu0 0.0
    %1088 = vmatprep.subr.mxu0 0.0
    %1089 = vmatpush1.msra.mxu0 0.0
    %1090 = vmatprep.subr.mxu0 0.0
    %1091 = vmatpush1.msra.mxu0 0.0
    %1092 = vmatprep.subr.mxu0 0.0
    %1093 = vmatpush1.msra.mxu0 0.0
    %1094 = vmatprep.subr.mxu0 0.0
    %1095 = vmatpush1.msra.mxu0 0.0
    %1096 = vmatprep.subr.mxu0 0.0
    %1097 = vmatpush1.msra.mxu0 0.0
    %1098 = vmatprep.subr.mxu0 0.0
    %1099 = vmatpush1.msra.mxu0 0.0
    %1100 = vmatprep.subr.mxu0 0.0
    %1101 = vmatpush1.msra.mxu0 0.0
    %1102 = vmatprep.subr.mxu0 0.0
    %1103 = vmatpush1.msra.mxu0 0.0
    %1104 = vmatprep.subr.mxu0 0.0
    %1105 = vmatpush1.msra.mxu0 0.0
    %1106 = vmatprep.subr.mxu0 0.0
    %1107 = vmatpush1.msra.mxu0 0.0
    %1108 = vmatprep.subr.mxu0 0.0
    %1109 = vmatpush1.msra.mxu0 0.0
    %1110 = vmatprep.subr.mxu0 0.0
    %1111 = vmatpush1.msra.mxu0 0.0
    %1112 = vmatprep.subr.mxu0 0.0
    %1113 = vmatpush1.msra.mxu0 0.0
    %1114 = vmatprep.subr.mxu0 0.0
    %1115 = vmatpush1.msra.mxu0 0.0
    %1116 = vmatprep.subr.mxu0 0.0
    %1117 = vmatpush1.msra.mxu0 0.0
    %1118 = vmatprep.subr.mxu0 0.0
    %1119 = vmatpush1.msra.mxu0 0.0
    %1120 = vmatprep.subr.mxu0 0.0
    %1121 = vmatpush1.msra.mxu0 0.0
    %1122 = vmatprep.subr.mxu0 0.0
    %1123 = vmatpush1.msra.mxu0 0.0
    %1124 = vmatprep.subr.mxu0 0.0
    %1125 = vmatpush1.msra.mxu0 0.0
    %1126 = vmatprep.subr.mxu0 0.0
    %1127 = vmatpush1.msra.mxu0 0.0
    %1128 = vmatprep.subr.mxu0 0.0
    %1129 = vmatpush1.msra.mxu0 0.0
    %1130 = vmatprep.subr.mxu0 0.0
    %1131 = vmatpush1.msra.mxu0 0.0
    %1132 = vmatprep.mubr.f32.mxu0 0.0
    %1133 = vmatmul.mubr.f32.gmra.mrb[0].mxu0 %v1063
    %v1134 = vpop.f32.mrb[0].mxu0
    %v1135 = vadd.f32 %v1060, %v1134
    %v1136 = vpop.f32.mrb[0].mxu0
    %1137 = vdwg.mxu0
    %1138 = vst [vmem:[#allocation9] sm:$0x3] %v1135
    // Predicated region
    $region50: #{tpu_custom_call.1} parent=1 // pred_check
      _
    $region51: #{tpu_custom_call.1} parent=1 // pred_check_branch
      %1140 = sbr.rel (0) target = $region53
    $region52: #{tpu_custom_call.1} parent=1 // pred_region
      %s1142 = ssub.s32 32, 32
      %1143 = vsyncadd [#allocation6], %s1142
      %s1145 = sshll.u32 [#allocation9], 4
      %s1146 = int_to_ptr.vmem [resolvable:$true] %s1145
      %1148 = dma.vmem_to_hbm [thread:$0]  %s1146, 32, %s10, [#allocation6]
    $region53: #{tpu_custom_call.1} parent=1 // pred_fallthru
      _
    // Predicated region
    $region54: #{tpu_custom_call.1} parent=1 // pred_check
      _
    $region55: #{tpu_custom_call.1} parent=1 // pred_check_branch
      %1150 = sbr.rel (0) target = $region57
    $region56: #{tpu_custom_call.1} parent=1 // pred_region
      %1151 = dma.done [#allocation6], 32
    $region57: #{tpu_custom_call.1} parent=1 // pred_fallthru
      _
    %1152 = vsyncpa [#allocation5], 1
    %1153 = vsyncpa [#allocation8], 1
    %1154 = vsyncpa [#allocation6], 1

</llo_original>
